<compile_context>
chip_gen: v6e
topology: v6e:2x2x1
jax: 0.10.0
libtpu: 0.0.40
codegen_flags: <defaults>
</compile_context>

<pallas_src>
import jax
import jax.numpy as jnp
from jax.experimental import pallas as pl
from jax.experimental.pallas import tpu as pltpu


def _round_up(x, m):
    return ((x + m - 1) // m) * m


def _make_kernel(rep):
    """Kernel closure; `rep` (state width) is a static Python int."""

    def kernel(obs_ref, wr_ref, br_ref, w1_ref, b1_ref, w2_ref, b2_ref, out_ref):
        # representation: Basic_MLP (Linear + ReLU)
        state = jnp.dot(obs_ref[...], wr_ref[...],
                        preferred_element_type=jnp.float32) + br_ref[...]
        state = jnp.maximum(state, 0.0)

        # fused actor/critic hidden layer: one matmul, 128-wide lane-dense intermediate
        h = jnp.dot(state, w1_ref[...],
                    preferred_element_type=jnp.float32) + b1_ref[...]
        h = jnp.maximum(h, 0.0)

        # fused block-diagonal head: logits in cols [0:ACT], value in col ACT, zero pad after
        head = jnp.dot(h, w2_ref[...],
                       preferred_element_type=jnp.float32) + b2_ref[...]

        # slab layout [ state | logits | value | pad ] — two static slice stores, no concat temporary
        out_ref[:, :rep] = state
        out_ref[:, rep:] = head

    return kernel


def pack_params(p):
    """Pre-fuse weights once: W1 = [wa1 | wc1]; block-diagonal zero-padded head W2/b2.

    Fusion assumes the actor and critic hidden layers share the same (ReLU) activation,
    as they do in this module; differing per-net activations would require separate matmuls.
    """
    wr, br = p["wr"], p["br"]
    wa1, ba1, wa2, ba2 = p["wa1"], p["ba1"], p["wa2"], p["ba2"]
    wc1, bc1, wc2, bc2 = p["wc1"], p["bc1"], p["wc2"], p["bc2"]

    rep = wr.shape[1]
    ah, act = wa2.shape
    ch = wc1.shape[1]

    slab_w = _round_up(rep + act + 1, 128)   # lane-dense total slab width
    head_w = slab_w - rep                    # lane-dense head block width

    w1 = jnp.concatenate([wa1, wc1], axis=1)          # (REP, AH+CH)
    b1 = jnp.concatenate([ba1, bc1], axis=1)          # (1, AH+CH)

    w2 = jnp.zeros((ah + ch, head_w), jnp.float32)
    w2 = w2.at[:ah, :act].set(wa2)                    # actor head block
    w2 = w2.at[ah:, act].set(wc2[:, 0])               # critic head column
    b2 = jnp.zeros((1, head_w), jnp.float32)
    b2 = b2.at[:, :act].set(ba2)
    b2 = b2.at[:, act].set(bc2[:, 0])

    return dict(wr=wr, br=br, w1=w1, b1=b1, w2=w2, b2=b2,
                rep=rep, act=act, slab_w=slab_w)


def make_actor_critic_forward(params, tb_max=1024):
    """Pack weights once and return a jitted forward(obs) -> (state, logits, value)."""
    pk = pack_params(params)
    rep, act, slab_w = pk["rep"], pk["act"], pk["slab_w"]
    obs_dim = pk["wr"].shape[0]
    hid = pk["w1"].shape[1]
    head_w = pk["w2"].shape[1]
    weights = (pk["wr"], pk["br"], pk["w1"], pk["b1"], pk["w2"], pk["b2"])
    kernel = _make_kernel(rep)

    def _run(obs, wr, br, w1, b1, w2, b2):
        B = obs.shape[0]

        # Padding-aware batch tiling: tiles up to tb_max rows, <8 rows of pad per tile,
        # and >= 2 (even) grid steps once B >= 256 so v7x's second TensorCore gets work.
        n_tiles = max(1, -(-B // tb_max))
        if B >= 256:
            n_tiles = max(n_tiles, 2)
        if n_tiles > 1 and n_tiles % 2:
            n_tiles += 1            # even step count -> balanced megacore split on v7x
        tb = _round_up(-(-B // n_tiles), 8)
        b_pad = n_tiles * tb
        if b_pad != B:
            obs = jnp.pad(obs, ((0, b_pad - B), (0, 0)))   # padded rows sliced away below

        def weight_spec(a):
            return pl.BlockSpec(a.shape, lambda i: (0,) * a.ndim)

        flops = 2 * b_pad * (obs_dim * rep + rep * hid + hid * head_w)
        bytes_accessed = 4 * (b_pad * (obs_dim + slab_w)
                              + sum(int(w.size) for w in (wr, br, w1, b1, w2, b2)))

        slab = pl.pallas_call(
            kernel,
            out_shape=jax.ShapeDtypeStruct((b_pad, slab_w), jnp.float32),
            grid=(n_tiles,),
            in_specs=[
                pl.BlockSpec((tb, obs_dim), lambda i: (i, 0)),
                weight_spec(wr), weight_spec(br),
                weight_spec(w1), weight_spec(b1),
                weight_spec(w2), weight_spec(b2),
            ],
            out_specs=pl.BlockSpec((tb, slab_w), lambda i: (i, 0)),
            compiler_params=pltpu.CompilerParams(
                dimension_semantics=("parallel",)),   # shard batch grid over both v7x TCs
            cost_estimate=pl.CostEstimate(flops=flops, transcendentals=0,
                                          bytes_accessed=bytes_accessed),
        )(obs, wr, br, w1, b1, w2, b2)

        state = slab[:B, :rep]
        logits = slab[:B, rep:rep + act]
        value = slab[:B, rep + act]
        return state, logits, value

    run = jax.jit(_run)

    def forward(obs):
        return run(obs, *weights)

    return forward


def init_params(key, obs_dim, rep_dim, actor_hidden, critic_hidden, action_dim):
    """Deterministic synthetic weights (stand-in for the torch initializer)."""
    ks = jax.random.split(key, 10)

    def lin(k, din, dout):
        scale = 1.0 / jnp.sqrt(jnp.float32(din))
        w = jax.random.uniform(k, (din, dout), jnp.float32, -scale, scale)
        b = jnp.zeros((1, dout), jnp.float32)
        return w, b

    wr, br = lin(ks[0], obs_dim, rep_dim)
    wa1, ba1 = lin(ks[1], rep_dim, actor_hidden)
    wa2, ba2 = lin(ks[2], actor_hidden, action_dim)
    wc1, bc1 = lin(ks[3], rep_dim, critic_hidden)
    wc2, bc2 = lin(ks[4], critic_hidden, 1)
    return dict(wr=wr, br=br, wa1=wa1, ba1=ba1, wa2=wa2, ba2=ba2,
                wc1=wc1, bc1=bc1, wc2=wc2, bc2=bc2)


def reference_forward(obs, p):
    state = jnp.maximum(obs @ p["wr"] + p["br"], 0.0)
    ha = jnp.maximum(state @ p["wa1"] + p["ba1"], 0.0)
    logits = ha @ p["wa2"] + p["ba2"]
    hc = jnp.maximum(state @ p["wc1"] + p["bc1"], 0.0)
    value = (hc @ p["wc2"] + p["bc2"])[:, 0]
    return state, logits, value


if __name__ == "__main__":
    key = jax.random.PRNGKey(0)
    k_obs, k_par, k_obs2 = jax.random.split(key, 3)

    # Small shapes implied by the module: batch of flat observations, MLP representation,
    # one hidden layer each for actor/critic, 8 discrete actions.
    B, OBS_DIM, REP_DIM, A_HID, C_HID, ACT_DIM = 8, 32, 64, 64, 64, 8

    obs = jax.random.normal(k_obs, (B, OBS_DIM), jnp.float32)
    params = init_params(k_par, OBS_DIM, REP_DIM, A_HID, C_HID, ACT_DIM)

    # Pack + fuse weights once; forward is jitted (pack_params no longer on the per-call path).
    forward = make_actor_critic_forward(params)

    state, logits, value = forward(obs)
    jax.block_until_ready((state, logits, value))

    # correctness vs plain-JAX reference (unfused weights)
    r_state, r_logits, r_value = reference_forward(obs, params)
    assert state.shape == (B, REP_DIM)
    assert logits.shape == (B, ACT_DIM)
    assert value.shape == (B,)
    assert jnp.allclose(state, r_state, atol=2e-5, rtol=1e-5)
    assert jnp.allclose(logits, r_logits, atol=2e-5, rtol=1e-5)
    assert jnp.allclose(value, r_value, atol=2e-5, rtol=1e-5)

    # batched path: padding-aware tiling (300 -> 2 tiles of 152, not 512) + 2-step parallel grid
    B2 = 300
    obs2 = jax.random.normal(k_obs2, (B2, OBS_DIM), jnp.float32)
    s2, l2, v2 = forward(obs2)
    jax.block_until_ready((s2, l2, v2))
    rs2, rl2, rv2 = reference_forward(obs2, params)
    assert s2.shape == (B2, REP_DIM) and l2.shape == (B2, ACT_DIM) and v2.shape == (B2,)
    assert jnp.allclose(s2, rs2, atol=2e-5, rtol=1e-5)
    assert jnp.allclose(l2, rl2, atol=2e-5, rtol=1e-5)
    assert jnp.allclose(v2, rv2, atol=2e-5, rtol=1e-5)

    print("KERNEL_OK")
</pallas_src>

<mosaic_0001>
module attributes {stable_mosaic.version = 11 : i64} {
  func.func @kernel(%arg0: i32, %arg1: memref<8x32xf32, #tpu.memory_space<vmem>>, %arg2: memref<32x64xf32, #tpu.memory_space<vmem>>, %arg3: memref<1x64xf32, #tpu.memory_space<vmem>>, %arg4: memref<64x128xf32, #tpu.memory_space<vmem>>, %arg5: memref<1x128xf32, #tpu.memory_space<vmem>>, %arg6: memref<128x64xf32, #tpu.memory_space<vmem>>, %arg7: memref<1x64xf32, #tpu.memory_space<vmem>>, %arg8: memref<8x128xf32, #tpu.memory_space<vmem>>) attributes {dimension_semantics = [#tpu.dimension_semantics<parallel>], iteration_bounds = array<i64: 1>, scalar_prefetch = 0 : i64, scratch_operands = 0 : i64, tpu.core_type = #tpu.core_type<tc>, window_params = [{transform_indices = @transform_0, window_bounds = array<i64: 8, 32>}, {pipeline_mode = #tpu.pipeline_mode<synchronous>, transform_indices = @transform_1, window_bounds = array<i64: 32, 64>}, {pipeline_mode = #tpu.pipeline_mode<synchronous>, transform_indices = @transform_2, window_bounds = array<i64: 1, 64>}, {pipeline_mode = #tpu.pipeline_mode<synchronous>, transform_indices = @transform_3, window_bounds = array<i64: 64, 128>}, {pipeline_mode = #tpu.pipeline_mode<synchronous>, transform_indices = @transform_4, window_bounds = array<i64: 1, 128>}, {pipeline_mode = #tpu.pipeline_mode<synchronous>, transform_indices = @transform_5, window_bounds = array<i64: 128, 64>}, {pipeline_mode = #tpu.pipeline_mode<synchronous>, transform_indices = @transform_6, window_bounds = array<i64: 1, 64>}, {transform_indices = @transform_7, window_bounds = array<i64: 8, 128>}]} {
    %c0 = arith.constant 0 : index
    %c0_0 = arith.constant 0 : index
    %0 = vector.load %arg1[%c0, %c0_0] : memref<8x32xf32, #tpu.memory_space<vmem>>, vector<8x32xf32>
    %c0_1 = arith.constant 0 : index
    %c0_2 = arith.constant 0 : index
    %1 = vector.load %arg2[%c0_1, %c0_2] : memref<32x64xf32, #tpu.memory_space<vmem>>, vector<32x64xf32>
    %cst = arith.constant dense<0.000000e+00> : vector<8x64xf32>
    %2 = tpu.matmul %0, %1, %cst {dimension_numbers = #tpu.dot_dimension_numbers<[1], [0], [0], [1], [0, 0, 1, 1], [], []>} : vector<8x32xf32>, vector<32x64xf32>, vector<8x64xf32> -> vector<8x64xf32>
    %c0_3 = arith.constant 0 : index
    %c0_4 = arith.constant 0 : index
    %3 = vector.load %arg3[%c0_3, %c0_4] : memref<1x64xf32, #tpu.memory_space<vmem>>, vector<1x64xf32>
    %4 = vector.broadcast %3 : vector<1x64xf32> to vector<8x64xf32>
    %5 = arith.addf %2, %4 : vector<8x64xf32>
    %cst_5 = arith.constant 0.000000e+00 : f32
    %6 = vector.broadcast %cst_5 : f32 to vector<8x64xf32>
    %7 = arith.maximumf %5, %6 : vector<8x64xf32>
    %c0_6 = arith.constant 0 : index
    %c0_7 = arith.constant 0 : index
    %8 = vector.load %arg4[%c0_6, %c0_7] : memref<64x128xf32, #tpu.memory_space<vmem>>, vector<64x128xf32>
    %cst_8 = arith.constant dense<0.000000e+00> : vector<8x128xf32>
    %9 = tpu.matmul %7, %8, %cst_8 {dimension_numbers = #tpu.dot_dimension_numbers<[1], [0], [0], [1], [0, 0, 1, 1], [], []>} : vector<8x64xf32>, vector<64x128xf32>, vector<8x128xf32> -> vector<8x128xf32>
    %c0_9 = arith.constant 0 : index
    %c0_10 = arith.constant 0 : index
    %10 = vector.load %arg5[%c0_9, %c0_10] : memref<1x128xf32, #tpu.memory_space<vmem>>, vector<1x128xf32>
    %11 = vector.broadcast %10 : vector<1x128xf32> to vector<8x128xf32>
    %12 = arith.addf %9, %11 : vector<8x128xf32>
    %cst_11 = arith.constant 0.000000e+00 : f32
    %13 = vector.broadcast %cst_11 : f32 to vector<8x128xf32>
    %14 = arith.maximumf %12, %13 : vector<8x128xf32>
    %c0_12 = arith.constant 0 : index
    %c0_13 = arith.constant 0 : index
    %15 = vector.load %arg6[%c0_12, %c0_13] : memref<128x64xf32, #tpu.memory_space<vmem>>, vector<128x64xf32>
    %cst_14 = arith.constant dense<0.000000e+00> : vector<8x64xf32>
    %16 = tpu.matmul %14, %15, %cst_14 {dimension_numbers = #tpu.dot_dimension_numbers<[1], [0], [0], [1], [0, 0, 1, 1], [], []>} : vector<8x128xf32>, vector<128x64xf32>, vector<8x64xf32> -> vector<8x64xf32>
    %c0_15 = arith.constant 0 : index
    %c0_16 = arith.constant 0 : index
    %17 = vector.load %arg7[%c0_15, %c0_16] : memref<1x64xf32, #tpu.memory_space<vmem>>, vector<1x64xf32>
    %18 = vector.broadcast %17 : vector<1x64xf32> to vector<8x64xf32>
    %19 = arith.addf %16, %18 : vector<8x64xf32>
    %c0_17 = arith.constant 0 : index
    %c0_18 = arith.constant 0 : index
    %20 = vector.load %arg8[%c0_17, %c0_18] : memref<8x128xf32, #tpu.memory_space<vmem>>, vector<8x64xf32>
    tpu.vector_store %arg8[%c0_17, %c0_18], %7 {strides = array<i32>} : memref<8x128xf32, #tpu.memory_space<vmem>>, vector<8x64xf32>,
    %c0_19 = arith.constant 0 : index
    %c64 = arith.constant 64 : index
    %21 = vector.load %arg8[%c0_19, %c64] : memref<8x128xf32, #tpu.memory_space<vmem>>, vector<8x64xf32>
    tpu.vector_store %arg8[%c0_19, %c64], %19 {strides = array<i32>} : memref<8x128xf32, #tpu.memory_space<vmem>>, vector<8x64xf32>,
    return
  }
  func.func @transform_0(%arg0: i32) -> (i32, i32) {
    %c0_i32 = arith.constant 0 : i32
    %c0_i32_0 = arith.constant 0 : i32
    return %arg0, %c0_i32 : i32, i32
  }
  func.func @transform_1(%arg0: i32) -> (i32, i32) {
    %c0_i32 = arith.constant 0 : i32
    %c0_i32_0 = arith.constant 0 : i32
    %c0_i32_1 = arith.constant 0 : i32
    return %c0_i32, %c0_i32_0 : i32, i32
  }
  func.func @transform_2(%arg0: i32) -> (i32, i32) {
    %c0_i32 = arith.constant 0 : i32
    %c0_i32_0 = arith.constant 0 : i32
    %c0_i32_1 = arith.constant 0 : i32
    return %c0_i32, %c0_i32_0 : i32, i32
  }
  func.func @transform_3(%arg0: i32) -> (i32, i32) {
    %c0_i32 = arith.constant 0 : i32
    %c0_i32_0 = arith.constant 0 : i32
    %c0_i32_1 = arith.constant 0 : i32
    return %c0_i32, %c0_i32_0 : i32, i32
  }
  func.func @transform_4(%arg0: i32) -> (i32, i32) {
    %c0_i32 = arith.constant 0 : i32
    %c0_i32_0 = arith.constant 0 : i32
    %c0_i32_1 = arith.constant 0 : i32
    return %c0_i32, %c0_i32_0 : i32, i32
  }
  func.func @transform_5(%arg0: i32) -> (i32, i32) {
    %c0_i32 = arith.constant 0 : i32
    %c0_i32_0 = arith.constant 0 : i32
    %c0_i32_1 = arith.constant 0 : i32
    return %c0_i32, %c0_i32_0 : i32, i32
  }
  func.func @transform_6(%arg0: i32) -> (i32, i32) {
    %c0_i32 = arith.constant 0 : i32
    %c0_i32_0 = arith.constant 0 : i32
    %c0_i32_1 = arith.constant 0 : i32
    return %c0_i32, %c0_i32_0 : i32, i32
  }
  func.func @transform_7(%arg0: i32) -> (i32, i32) {
    %c0_i32 = arith.constant 0 : i32
    %c0_i32_0 = arith.constant 0 : i32
    return %arg0, %c0_i32 : i32, i32
  }
}

</mosaic_0001>

<llo_original>
// kernel: _run.1
$region0: #{_run.1}
  #allocation0 [shape = 'u32[]', space=smem, size = 0x4, offset = 0x4, fixed_abs, tag = 'smem constant byte address 0x4 - core index']
  #allocation1 [shape = 'u32[144,128]{1,0:T(1,128)}', space=vmem, size = 0x12000, scoped, tag = 'internal scratch']
  %s0 = inlined_call_operand.vmem [shape: f32[8,32], index: 0, kind: input, shape index: {}]
  %s1 = inlined_call_operand.vmem [shape: f32[32,64], index: 1, kind: input, shape index: {}]
  %s2 = inlined_call_operand.vmem [shape: f32[1,64], index: 2, kind: input, shape index: {}]
  %s3 = inlined_call_operand.vmem [shape: f32[64,128], index: 3, kind: input, shape index: {}]
  %s4 = inlined_call_operand.vmem [shape: f32[1,128], index: 4, kind: input, shape index: {}]
  %s5 = inlined_call_operand.vmem [shape: f32[128,64], index: 5, kind: input, shape index: {}]
  %s6 = inlined_call_operand.vmem [shape: f32[1,64], index: 6, kind: input, shape index: {}]
  %s7 = inlined_call_operand.vmem [shape: f32[8,128], index: 7, kind: output, shape index: {}]
  %s8 = sld [smem:[#allocation0]]
  $region38: #{_run.1} parent=0
    _
  %s10 = ssub.s32 1, %s8
  %s11 = scalar_select 0, %s10, %s8
  // Predicated region
  $region2: #{_run.1} parent=0 // pred_check
    _
  $region3: #{_run.1} parent=0 // pred_check_branch
    %13 = sbr.rel (0) target = $region5
  $region4: #{_run.1} parent=0 // pred_region
    _
  $region5: #{_run.1} parent=0 // pred_fallthru
    _
  // Predicated region
  $region6: #{_run.1} parent=0 // pred_check
    _
  $region7: #{_run.1} parent=0 // pred_check_branch
    %15 = sbr.rel (0) target = $region9
  $region8: #{_run.1} parent=0 // pred_region
    _
  $region9: #{_run.1} parent=0 // pred_fallthru
    _
  // Predicated region
  $region10: #{_run.1} parent=0 // pred_check
    _
  $region11: #{_run.1} parent=0 // pred_check_branch
    %17 = sbr.rel (0) target = $region13
  $region12: #{_run.1} parent=0 // pred_region
    _
  $region13: #{_run.1} parent=0 // pred_fallthru
    _
  // Predicated region
  $region14: #{_run.1} parent=0 // pred_check
    _
  $region15: #{_run.1} parent=0 // pred_check_branch
    %19 = sbr.rel (0) target = $region17
  $region16: #{_run.1} parent=0 // pred_region
    _
  $region17: #{_run.1} parent=0 // pred_fallthru
    _
  // Predicated region
  $region18: #{_run.1} parent=0 // pred_check
    _
  $region19: #{_run.1} parent=0 // pred_check_branch
    %21 = sbr.rel (0) target = $region21
  $region20: #{_run.1} parent=0 // pred_region
    _
  $region21: #{_run.1} parent=0 // pred_fallthru
    _
  // Predicated region
  $region22: #{_run.1} parent=0 // pred_check
    _
  $region23: #{_run.1} parent=0 // pred_check_branch
    %23 = sbr.rel (0) target = $region25
  $region24: #{_run.1} parent=0 // pred_region
    _
  $region25: #{_run.1} parent=0 // pred_fallthru
    _
  // Predicated region
  $region26: #{_run.1} parent=0 // pred_check
    _
  $region27: #{_run.1} parent=0 // pred_check_branch
    %25 = sbr.rel (0) target = $region29
  $region28: #{_run.1} parent=0 // pred_region
    _
  $region29: #{_run.1} parent=0 // pred_fallthru
    _
  %v26 = vld [vmem:[%s0] sm:$0xff]
  %v27 = vld [vmem:[%s1] sm:$0xff]
  %v28 = vld [vmem:[%s1 + $0x8] sm:$0xff]
  %v29 = vld [vmem:[%s1 + $0x10] sm:$0xff]
  %v30 = vld [vmem:[%s1 + $0x18] sm:$0xff]
  %v31 = vld [vmem:[%s2] sm:$0x1]
  %v33 = vlaneseq
  %v34 = vshrl.u32 %v33, 7
  %v35 = vsub.s32 0, %v34
  %v36 = vrot.slane %v31, %v35
  %vm38 = vcmask 261120
  %v40 = vsel %vm38, %v26, 0
  %42 = vmatprep.subr.mxu0 0.0
  %43 = vmatpush1.msra.mxu0 0.0
  %44 = vmatprep.subr.mxu0 0.0
  %45 = vmatpush1.msra.mxu0 0.0
  %46 = vmatprep.subr.mxu0 0.0
  %47 = vmatpush1.msra.mxu0 0.0
  %48 = vmatprep.subr.mxu0 0.0
  %49 = vmatpush1.msra.mxu0 0.0
  %50 = vmatprep.subr.mxu0 0.0
  %51 = vmatpush1.msra.mxu0 0.0
  %52 = vmatprep.subr.mxu0 0.0
  %53 = vmatpush1.msra.mxu0 0.0
  %54 = vmatprep.subr.mxu0 0.0
  %55 = vmatpush1.msra.mxu0 0.0
  %56 = vmatprep.subr.mxu0 0.0
  %57 = vmatpush1.msra.mxu0 0.0
  %58 = vmatprep.subr.mxu0 0.0
  %59 = vmatpush1.msra.mxu0 0.0
  %60 = vmatprep.subr.mxu0 0.0
  %61 = vmatpush1.msra.mxu0 0.0
  %62 = vmatprep.subr.mxu0 0.0
  %63 = vmatpush1.msra.mxu0 0.0
  %64 = vmatprep.subr.mxu0 0.0
  %65 = vmatpush1.msra.mxu0 0.0
  %66 = vmatprep.subr.mxu0 0.0
  %67 = vmatpush1.msra.mxu0 %v30
  %68 = vmatprep.subr.mxu0 0.0
  %69 = vmatpush1.msra.mxu0 %v29
  %70 = vmatprep.subr.mxu0 0.0
  %71 = vmatpush1.msra.mxu0 %v28
  %72 = vmatprep.subr.mxu0 0.0
  %73 = vmatpush1.msra.mxu0 %v27
  %74 = vmatprep.subr.mxu0 0.0
  %75 = vmatpush2.msra.mxu0 0.0
  %76 = vmatprep.subr.mxu0 0.0
  %77 = vmatpush2.msra.mxu0 0.0
  %78 = vmatprep.subr.mxu0 0.0
  %79 = vmatpush2.msra.mxu0 0.0
  %80 = vmatprep.subr.mxu0 0.0
  %81 = vmatpush2.msra.mxu0 0.0
  %82 = vmatprep.subr.mxu0 0.0
  %83 = vmatpush2.msra.mxu0 0.0
  %84 = vmatprep.subr.mxu0 0.0
  %85 = vmatpush2.msra.mxu0 0.0
  %86 = vmatprep.subr.mxu0 0.0
  %87 = vmatpush2.msra.mxu0 0.0
  %88 = vmatprep.subr.mxu0 0.0
  %89 = vmatpush2.msra.mxu0 0.0
  %90 = vmatprep.subr.mxu0 0.0
  %91 = vmatpush2.msra.mxu0 0.0
  %92 = vmatprep.subr.mxu0 0.0
  %93 = vmatpush2.msra.mxu0 0.0
  %94 = vmatprep.subr.mxu0 0.0
  %95 = vmatpush2.msra.mxu0 0.0
  %96 = vmatprep.subr.mxu0 0.0
  %97 = vmatpush2.msra.mxu0 0.0
  %98 = vmatprep.subr.mxu0 0.0
  %99 = vmatpush2.msra.mxu0 0.0
  %100 = vmatprep.subr.mxu0 0.0
  %101 = vmatpush2.msra.mxu0 0.0
  %102 = vmatprep.subr.mxu0 0.0
  %103 = vmatpush2.msra.mxu0 0.0
  %104 = vmatprep.subr.mxu0 0.0
  %105 = vmatpush2.msra.mxu0 0.0
  %106 = vmatprep.mubr.f32.mxu0 0.0
  %107 = vmatmul.mubr.f32.gmra.mxu0 %v40
  %v108 = vpop.f32.mrf.mxu0
  %v109 = vadd.f32 %v36, %v108
  %v110 = vpop.f32.mrf.mxu0
  %111 = vdwg.mxu0
  %v112 = vmax.f32 %v109, 0.0
  %v113 = vld [vmem:[%s3] sm:$0xff]
  %v114 = vld [vmem:[%s3 + $0x8] sm:$0xff]
  %v115 = vld [vmem:[%s3 + $0x10] sm:$0xff]
  %v116 = vld [vmem:[%s3 + $0x18] sm:$0xff]
  %v117 = vld [vmem:[%s3 + $0x20] sm:$0xff]
  %v118 = vld [vmem:[%s3 + $0x28] sm:$0xff]
  %v119 = vld [vmem:[%s3 + $0x30] sm:$0xff]
  %v120 = vld [vmem:[%s3 + $0x38] sm:$0xff]
  %v121 = vld [vmem:[%s4] sm:$0x1]
  %v123 = vlaneseq
  %v124 = vshrl.u32 %v123, 7
  %v125 = vsub.s32 0, %v124
  %v126 = vrot.slane %v121, %v125
  %vm128 = vcmask 523264
  %v130 = vsel %vm128, %v112, 0
  %132 = vmatprep.subr.mxu0 0.0
  %133 = vmatpush1.msra.mxu0 0.0
  %134 = vmatprep.subr.mxu0 0.0
  %135 = vmatpush1.msra.mxu0 0.0
  %136 = vmatprep.subr.mxu0 0.0
  %137 = vmatpush1.msra.mxu0 0.0
  %138 = vmatprep.subr.mxu0 0.0
  %139 = vmatpush1.msra.mxu0 0.0
  %140 = vmatprep.subr.mxu0 0.0
  %141 = vmatpush1.msra.mxu0 0.0
  %142 = vmatprep.subr.mxu0 0.0
  %143 = vmatpush1.msra.mxu0 0.0
  %144 = vmatprep.subr.mxu0 0.0
  %145 = vmatpush1.msra.mxu0 0.0
  %146 = vmatprep.subr.mxu0 0.0
  %147 = vmatpush1.msra.mxu0 0.0
  %148 = vmatprep.subr.mxu0 0.0
  %149 = vmatpush1.msra.mxu0 %v120
  %150 = vmatprep.subr.mxu0 0.0
  %151 = vmatpush1.msra.mxu0 %v119
  %152 = vmatprep.subr.mxu0 0.0
  %153 = vmatpush1.msra.mxu0 %v118
  %154 = vmatprep.subr.mxu0 0.0
  %155 = vmatpush1.msra.mxu0 %v117
  %156 = vmatprep.subr.mxu0 0.0
  %157 = vmatpush1.msra.mxu0 %v116
  %158 = vmatprep.subr.mxu0 0.0
  %159 = vmatpush1.msra.mxu0 %v115
  %160 = vmatprep.subr.mxu0 0.0
  %161 = vmatpush1.msra.mxu0 %v114
  %162 = vmatprep.subr.mxu0 0.0
  %163 = vmatpush1.msra.mxu0 %v113
  %164 = vmatprep.subr.mxu0 0.0
  %165 = vmatpush2.msra.mxu0 0.0
  %166 = vmatprep.subr.mxu0 0.0
  %167 = vmatpush2.msra.mxu0 0.0
  %168 = vmatprep.subr.mxu0 0.0
  %169 = vmatpush2.msra.mxu0 0.0
  %170 = vmatprep.subr.mxu0 0.0
  %171 = vmatpush2.msra.mxu0 0.0
  %172 = vmatprep.subr.mxu0 0.0
  %173 = vmatpush2.msra.mxu0 0.0
  %174 = vmatprep.subr.mxu0 0.0
  %175 = vmatpush2.msra.mxu0 0.0
  %176 = vmatprep.subr.mxu0 0.0
  %177 = vmatpush2.msra.mxu0 0.0
  %178 = vmatprep.subr.mxu0 0.0
  %179 = vmatpush2.msra.mxu0 0.0
  %180 = vmatprep.subr.mxu0 0.0
  %181 = vmatpush2.msra.mxu0 0.0
  %182 = vmatprep.subr.mxu0 0.0
  %183 = vmatpush2.msra.mxu0 0.0
  %184 = vmatprep.subr.mxu0 0.0
  %185 = vmatpush2.msra.mxu0 0.0
  %186 = vmatprep.subr.mxu0 0.0
  %187 = vmatpush2.msra.mxu0 0.0
  %188 = vmatprep.subr.mxu0 0.0
  %189 = vmatpush2.msra.mxu0 0.0
  %190 = vmatprep.subr.mxu0 0.0
  %191 = vmatpush2.msra.mxu0 0.0
  %192 = vmatprep.subr.mxu0 0.0
  %193 = vmatpush2.msra.mxu0 0.0
  %194 = vmatprep.subr.mxu0 0.0
  %195 = vmatpush2.msra.mxu0 0.0
  %196 = vmatprep.mubr.f32.mxu0 0.0
  %197 = vmatmul.mubr.f32.gmra.mxu0 %v130
  %v198 = vpop.f32.mrf.mxu0
  %v199 = vadd.f32 %v126, %v198
  %v200 = vpop.f32.mrf.mxu0
  %201 = vdwg.mxu0
  %v202 = vmax.f32 %v199, 0.0
  %v203 = vld [vmem:[%s5] sm:$0xff]
  %v204 = vld [vmem:[%s5 + $0x8] sm:$0xff]
  %v205 = vld [vmem:[%s5 + $0x10] sm:$0xff]
  %v206 = vld [vmem:[%s5 + $0x18] sm:$0xff]
  %v207 = vld [vmem:[%s5 + $0x20] sm:$0xff]
  %v208 = vld [vmem:[%s5 + $0x28] sm:$0xff]
  %v209 = vld [vmem:[%s5 + $0x30] sm:$0xff]
  %v210 = vld [vmem:[%s5 + $0x38] sm:$0xff]
  %v211 = vld [vmem:[%s5 + $0x40] sm:$0xff]
  %v212 = vld [vmem:[%s5 + $0x48] sm:$0xff]
  %v213 = vld [vmem:[%s5 + $0x50] sm:$0xff]
  %v214 = vld [vmem:[%s5 + $0x58] sm:$0xff]
  %v215 = vld [vmem:[%s5 + $0x60] sm:$0xff]
  %v216 = vld [vmem:[%s5 + $0x68] sm:$0xff]
  %v217 = vld [vmem:[%s5 + $0x70] sm:$0xff]
  %v218 = vld [vmem:[%s5 + $0x78] sm:$0xff]
  %v219 = vld [vmem:[%s6] sm:$0x1]
  %v221 = vlaneseq
  %v222 = vshrl.u32 %v221, 7
  %v223 = vsub.s32 0, %v222
  %v224 = vrot.slane %v219, %v223
  %226 = vmatprep.subr.mxu0 0.0
  %227 = vmatpush1.msra.mxu0 %v218
  %228 = vmatprep.subr.mxu0 0.0
  %229 = vmatpush1.msra.mxu0 %v217
  %230 = vmatprep.subr.mxu0 0.0
  %231 = vmatpush1.msra.mxu0 %v216
  %232 = vmatprep.subr.mxu0 0.0
  %233 = vmatpush1.msra.mxu0 %v215
  %234 = vmatprep.subr.mxu0 0.0
  %235 = vmatpush1.msra.mxu0 %v214
  %236 = vmatprep.subr.mxu0 0.0
  %237 = vmatpush1.msra.mxu0 %v213
  %238 = vmatprep.subr.mxu0 0.0
  %239 = vmatpush1.msra.mxu0 %v212
  %240 = vmatprep.subr.mxu0 0.0
  %241 = vmatpush1.msra.mxu0 %v211
  %242 = vmatprep.subr.mxu0 0.0
  %243 = vmatpush1.msra.mxu0 %v210
  %244 = vmatprep.subr.mxu0 0.0
  %245 = vmatpush1.msra.mxu0 %v209
  %246 = vmatprep.subr.mxu0 0.0
  %247 = vmatpush1.msra.mxu0 %v208
  %248 = vmatprep.subr.mxu0 0.0
  %249 = vmatpush1.msra.mxu0 %v207
  %250 = vmatprep.subr.mxu0 0.0
  %251 = vmatpush1.msra.mxu0 %v206
  %252 = vmatprep.subr.mxu0 0.0
  %253 = vmatpush1.msra.mxu0 %v205
  %254 = vmatprep.subr.mxu0 0.0
  %255 = vmatpush1.msra.mxu0 %v204
  %256 = vmatprep.subr.mxu0 0.0
  %257 = vmatpush1.msra.mxu0 %v203
  %258 = vmatprep.subr.mxu0 0.0
  %259 = vmatpush2.msra.mxu0 0.0
  %260 = vmatprep.subr.mxu0 0.0
  %261 = vmatpush2.msra.mxu0 0.0
  %262 = vmatprep.subr.mxu0 0.0
  %263 = vmatpush2.msra.mxu0 0.0
  %264 = vmatprep.subr.mxu0 0.0
  %265 = vmatpush2.msra.mxu0 0.0
  %266 = vmatprep.subr.mxu0 0.0
  %267 = vmatpush2.msra.mxu0 0.0
  %268 = vmatprep.subr.mxu0 0.0
  %269 = vmatpush2.msra.mxu0 0.0
  %270 = vmatprep.subr.mxu0 0.0
  %271 = vmatpush2.msra.mxu0 0.0
  %272 = vmatprep.subr.mxu0 0.0
  %273 = vmatpush2.msra.mxu0 0.0
  %274 = vmatprep.subr.mxu0 0.0
  %275 = vmatpush2.msra.mxu0 0.0
  %276 = vmatprep.subr.mxu0 0.0
  %277 = vmatpush2.msra.mxu0 0.0
  %278 = vmatprep.subr.mxu0 0.0
  %279 = vmatpush2.msra.mxu0 0.0
  %280 = vmatprep.subr.mxu0 0.0
  %281 = vmatpush2.msra.mxu0 0.0
  %282 = vmatprep.subr.mxu0 0.0
  %283 = vmatpush2.msra.mxu0 0.0
  %284 = vmatprep.subr.mxu0 0.0
  %285 = vmatpush2.msra.mxu0 0.0
  %286 = vmatprep.subr.mxu0 0.0
  %287 = vmatpush2.msra.mxu0 0.0
  %288 = vmatprep.subr.mxu0 0.0
  %289 = vmatpush2.msra.mxu0 0.0
  %290 = vmatprep.mubr.f32.mxu0 0.0
  %291 = vmatmul.mubr.f32.gmra.mxu0 %v202
  %v292 = vpop.f32.mrf.mxu0
  %v293 = vadd.f32 %v224, %v292
  %v294 = vpop.f32.mrf.mxu0
  %295 = vdwg.mxu0
  %296 = vst.msk [vmem:[%s7] sm:$0xff] %vm128, %v112
  %298 = vrot.lane.b32.xlu0 %v293, 64
  %v299 = vpop.permute.xlu0 %298
  %vm301 = vcmask 1048064
  %302 = vst.msk [vmem:[%s7] sm:$0xff] %vm301, %v299
  // Predicated region
  $region30: #{_run.1} parent=0 // pred_check
    _
  $region31: #{_run.1} parent=0 // pred_check_branch
    %304 = sbr.rel (0) target = $region33
  $region32: #{_run.1} parent=0 // pred_region
    _
  $region33: #{_run.1} parent=0 // pred_fallthru
    _
  // Predicated region
  $region34: #{_run.1} parent=0 // pred_check
    _
  $region35: #{_run.1} parent=0 // pred_check_branch
    %306 = sbr.rel (0) target = $region37
  $region36: #{_run.1} parent=0 // pred_region
    _
  $region37: #{_run.1} parent=0 // pred_fallthru
    _

</llo_original>
